<compile_context>
chip_gen: v5e
topology: v5e:2x2
jax: 0.10.0
libtpu: 0.0.40
codegen_flags: <defaults>
</compile_context>

<pallas_src>
import functools

import jax
import jax.numpy as jnp
from jax.experimental import pallas as pl
from jax.experimental.pallas import tpu as pltpu

ATTN_HIDDEN = 128  # hidden width of the attention MLP (fixed in the PyTorch module)


def _pad_lanes(x, width):
    """Zero-pad the last (lane) axis of x up to `width`."""
    pad = width - x.shape[-1]
    if pad == 0:
        return x
    cfg = [(0, 0)] * (x.ndim - 1) + [(0, pad)]
    return jnp.pad(x, cfg)


# --------------------------------------------------------------------------- #
# Kernels
# --------------------------------------------------------------------------- #
def _gnn_kernel(num_layers, feature_dim,
                feat_ref, w_path_ref, wl_ref, vecs_ref, wo_ref, bo_ref, out_ref):
    D = feature_dim
    A = ATTN_HIDDEN
    feats = feat_ref[...]                                   # (N, D) f32
    N = feats.shape[0]

    wo1 = wo_ref[0]                                         # (D, D)
    wo2 = wo_ref[1]                                         # (D, D)
    bo1 = bo_ref[0]                                         # (1, D)
    bo2 = bo_ref[1]                                         # (1, D)

    # --- output_transform on the full (sublane-aligned) tile.  Rows 1..N-1
    # (the path states) never change inside the GNN layers, so their transform
    # is final; row 0 is overwritten with the updated target's transform below.
    # This matmul is independent of the serial per-layer target chain.
    h_full = jnp.maximum(
        jnp.dot(feats, wo1, preferred_element_type=jnp.float32) + bo1, 0.0)
    out_ref[...] = jnp.dot(h_full, wo2, preferred_element_type=jnp.float32) + bo2

    # --- hoisted path-side attention projection for every layer at once:
    # (N, L*128); layer l lives at lanes [l*128, (l+1)*128).
    h_path_all = jnp.dot(feats, w_path_ref[...], preferred_element_type=jnp.float32)

    # Row 0 is the target node; exclude it from the "path" rows with a VPU mask
    # instead of an unaligned sublane slice.
    not_target = jax.lax.broadcasted_iota(jnp.int32, (N, 1), 0) != 0

    tgt = feats[0:1, :]                                     # (1, D) aligned slice

    for l in range(num_layers):                             # static unrolled layer loop
        ba1 = vecs_ref[l, 0:1, :]                           # (1, 128)
        wa2 = vecs_ref[l, 1:2, :]                           # (1, 128)  == W_a2^T
        ba2 = vecs_ref[l, 2:3, 0:1]                         # (1, 1)
        bg = vecs_ref[l, 3:4, 0:D]                          # (1, D)
        bu1 = vecs_ref[l, 4:5, 0:D]                         # (1, D)
        bu2 = vecs_ref[l, 5:6, 0:D]                         # (1, D)

        # One fused target-side matmul: [h_t | gate_t(pad) | hu_t(pad)] lanes.
        proj_t = jnp.dot(tgt, wl_ref[l, :, 0:3 * A],
                         preferred_element_type=jnp.float32)            # (1, 384)
        h_t = proj_t[:, 0:A]                                             # (1, 128)
        gate_t = proj_t[:, A:A + D]                                      # (1, D)
        hu_t = proj_t[:, 2 * A:2 * A + D]                                # (1, D)

        # Attention sigmoid(MLP(cat([target, source_i]))) for all rows at once;
        # the bogus row-0 value is masked out before normalization.
        h = jnp.maximum(h_t + ba1 + h_path_all[:, l * A:(l + 1) * A], 0.0)   # (N, 128)
        logits = jnp.sum(h * wa2, axis=-1, keepdims=True) + ba2              # (N, 1)
        attn = jnp.where(not_target, jax.nn.sigmoid(logits), 0.0)            # (N, 1)
        s = jnp.sum(attn)
        # NOTE: exact divide kept (instead of pl.reciprocal approx) to preserve
        # the 1e-5 match against the reference; sigmoid > 0 makes the guard moot.
        attn = jnp.where(s > 0.0, attn / s, attn)

        # Weighted aggregation of path states (row 0 contributes exactly 0).
        agg = jnp.sum(feats * attn, axis=0, keepdims=True)                   # (1, D)

        # One fused aggregated-side matmul: [gate_a(pad) | hu_a(pad)] lanes.
        proj_a = jnp.dot(agg, wl_ref[l, :, 3 * A:5 * A],
                         preferred_element_type=jnp.float32)                 # (1, 256)
        gate_a = proj_a[:, 0:D]                                              # (1, D)
        hu_a = proj_a[:, A:A + D]                                            # (1, D)

        gate = jax.nn.sigmoid(gate_t + gate_a + bg)                          # (1, D)
        hu = jnp.maximum(hu_t + hu_a + bu1, 0.0)                             # (1, D)
        upd = jnp.dot(hu, wl_ref[l, :, 5 * A:6 * A],
                      preferred_element_type=jnp.float32)[:, 0:D] + bu2      # (1, D)
        tgt = tgt + gate * upd                                               # (1, D)

    # --- output_transform of the updated target row only; overwrite row 0.
    h_tgt = jnp.maximum(
        jnp.dot(tgt, wo1, preferred_element_type=jnp.float32) + bo1, 0.0)
    out_ref[0:1, :] = jnp.dot(h_tgt, wo2, preferred_element_type=jnp.float32) + bo2


def _output_only_kernel(feat_ref, wo_ref, bo_ref, out_ref):
    """N <= 1 or num_layers == 0: GNN layers are identity on the features."""
    feats = feat_ref[...]
    h = jnp.maximum(
        jnp.dot(feats, wo_ref[0], preferred_element_type=jnp.float32) + bo_ref[0], 0.0)
    out_ref[...] = jnp.dot(h, wo_ref[1], preferred_element_type=jnp.float32) + bo_ref[1]


# --------------------------------------------------------------------------- #
# Parameters
# --------------------------------------------------------------------------- #
def init_params(key, feature_dim, num_layers, dtype=jnp.float32):
    """Deterministic synthetic parameters (shapes match the PyTorch module)."""
    D = feature_dim
    L = num_layers
    names_shapes = [
        ("wa1", (L, 2 * D, ATTN_HIDDEN)), ("ba1", (L, 1, ATTN_HIDDEN)),
        ("wa2", (L, 1, ATTN_HIDDEN)),     ("ba2", (L, 1, 1)),
        ("wu1", (L, 2 * D, D)),           ("bu1", (L, 1, D)),
        ("wu2", (L, D, D)),               ("bu2", (L, 1, D)),
        ("wg",  (L, 2 * D, D)),           ("bg",  (L, 1, D)),
        ("wo1", (D, D)),                  ("bo1", (1, D)),
        ("wo2", (D, D)),                  ("bo2", (1, D)),
    ]
    keys = jax.random.split(key, len(names_shapes))
    params = {}
    for (name, shape), k in zip(names_shapes, keys):
        params[name] = (0.1 * jax.random.normal(k, shape)).astype(dtype)
    return params


def pack_params(params, feature_dim, num_layers):
    """Fuse/pad parameters into a handful of lane-aligned buffers (host-side, once)."""
    D, L, A = feature_dim, num_layers, ATTN_HIDDEN
    assert D <= A, "packing layout assumes feature_dim <= 128"

    packed = {
        "wo": jnp.stack([params["wo1"], params["wo2"]], axis=0),   # (2, D, D)
        "bo": jnp.stack([params["bo1"], params["bo2"]], axis=0),   # (2, 1, D)
    }
    if L == 0:
        return packed

    wa1, wu1, wg, wu2 = params["wa1"], params["wu1"], params["wg"], params["wu2"]

    # Path-side attention weights for every layer, layers laid along lanes: (D, L*128).
    packed["w_path"] = jnp.concatenate([wa1[l, D:, :] for l in range(L)], axis=1)

    # Per-layer fused weights (L, D, 6*128); each logical block padded to 128 lanes
    # so every in-kernel slice starts at a multiple of 128.
    packed["wl"] = jnp.concatenate([
        wa1[:, :D, :],                      # 0A:1A  target-side attention
        _pad_lanes(wg[:, :D, :], A),        # 1A:2A  target-side gate
        _pad_lanes(wu1[:, :D, :], A),       # 2A:3A  target-side update (hidden)
        _pad_lanes(wg[:, D:, :], A),        # 3A:4A  agg-side gate
        _pad_lanes(wu1[:, D:, :], A),       # 4A:5A  agg-side update (hidden)
        _pad_lanes(wu2, A),                 # 5A:6A  update second linear
    ], axis=2)

    # Per-layer bias/vector rows packed into a single (L, 8, 128) tile.
    packed["vecs"] = jnp.concatenate([
        params["ba1"],                      # row 0: attention hidden bias
        params["wa2"],                      # row 1: attention output weights (as a row)
        _pad_lanes(params["ba2"], A),       # row 2: attention output bias (lane 0)
        _pad_lanes(params["bg"], A),        # row 3: gate bias
        _pad_lanes(params["bu1"], A),       # row 4: update hidden bias
        _pad_lanes(params["bu2"], A),       # row 5: update output bias
        jnp.zeros((L, 2, A), params["ba1"].dtype),  # rows 6-7: padding
    ], axis=1)
    return packed


# --------------------------------------------------------------------------- #
# Wrapper
# --------------------------------------------------------------------------- #
def policy_value_gnn(features, packed_params, *, num_layers):
    """Pallas implementation of PolicyValueGNN.forward (single graph, all-resident)."""
    # TODO(synk): for a batch of graphs, add a leading grid axis with
    # dimension_semantics=("parallel",) so v7x's second TensorCore is used.
    N, D = features.shape
    vmem = pl.BlockSpec(memory_space=pltpu.MemorySpace.VMEM)
    apply_layers = (N > 1) and (num_layers > 0)

    if apply_layers:
        kernel = functools.partial(_gnn_kernel, num_layers, D)
        args = (features, packed_params["w_path"], packed_params["wl"],
                packed_params["vecs"], packed_params["wo"], packed_params["bo"])
    else:
        kernel = _output_only_kernel
        args = (features, packed_params["wo"], packed_params["bo"])

    return pl.pallas_call(
        kernel,
        out_shape=jax.ShapeDtypeStruct((N, D), jnp.float32),
        in_specs=[vmem] * len(args),
        out_specs=vmem,
    )(*args)


# --------------------------------------------------------------------------- #
# Pure-JAX reference (mirrors the PyTorch forward exactly)
# --------------------------------------------------------------------------- #
def policy_value_gnn_ref(features, params, *, num_layers):
    x = features
    if x.shape[0] > 1 and num_layers > 0:
        D = features.shape[1]
        tgt = x[0:1]
        path = x[1:]
        for l in range(num_layers):
            wa1, ba1 = params["wa1"][l], params["ba1"][l]
            wa2, ba2 = params["wa2"][l], params["ba2"][l]
            wu1, bu1 = params["wu1"][l], params["bu1"][l]
            wu2, bu2 = params["wu2"][l], params["bu2"][l]
            wg, bg = params["wg"][l], params["bg"][l]

            combined = jnp.concatenate(
                [jnp.broadcast_to(tgt, path.shape), path], axis=1)      # (N-1, 2D)
            h = jnp.maximum(combined @ wa1 + ba1, 0.0)
            attn = jax.nn.sigmoid(jnp.sum(h * wa2, axis=-1, keepdims=True) + ba2)
            s = jnp.sum(attn)
            attn = jnp.where(s > 0.0, attn / s, attn)
            agg = jnp.sum(path * attn, axis=0, keepdims=True)

            comb2 = jnp.concatenate([tgt, agg], axis=1)
            gate = jax.nn.sigmoid(comb2 @ wg + bg)
            upd = jnp.maximum(comb2 @ wu1 + bu1, 0.0) @ wu2 + bu2
            tgt = tgt + gate * upd
        x = jnp.concatenate([tgt, path], axis=0)
    h = jnp.maximum(x @ params["wo1"] + params["bo1"], 0.0)
    return h @ params["wo2"] + params["bo2"]


# --------------------------------------------------------------------------- #
if __name__ == "__main__":
    FEATURE_DIM = 32
    NUM_LAYERS = 2
    NUM_NODES = 8   # row 0 = target, rows 1..7 = path states

    key = jax.random.PRNGKey(0)
    k_feat, k_param = jax.random.split(key)
    features = jax.random.normal(k_feat, (NUM_NODES, FEATURE_DIM), dtype=jnp.float32)
    params = init_params(k_param, FEATURE_DIM, NUM_LAYERS)
    packed = jax.tree_util.tree_map(
        jax.block_until_ready, pack_params(params, FEATURE_DIM, NUM_LAYERS))

    out = policy_value_gnn(features, packed, num_layers=NUM_LAYERS)
    out = jax.block_until_ready(out)

    ref = jax.block_until_ready(
        policy_value_gnn_ref(features, params, num_layers=NUM_LAYERS))
    assert out.shape == (NUM_NODES, FEATURE_DIM)
    assert jnp.allclose(out, ref, atol=1e-5, rtol=1e-5), "mismatch vs pure-JAX reference"

    print("KERNEL_OK")
</pallas_src>

<mosaic_0001>
module attributes {stable_mosaic.version = 11 : i64} {
  func.func @_gnn_kernel(%arg0: memref<8x32xf32, #tpu.memory_space<vmem>>, %arg1: memref<32x256xf32, #tpu.memory_space<vmem>>, %arg2: memref<2x32x768xf32, #tpu.memory_space<vmem>>, %arg3: memref<2x8x128xf32, #tpu.memory_space<vmem>>, %arg4: memref<2x32x32xf32, #tpu.memory_space<vmem>>, %arg5: memref<2x1x32xf32, #tpu.memory_space<vmem>>, %arg6: memref<8x32xf32, #tpu.memory_space<vmem>>) attributes {dimension_semantics = [], scalar_prefetch = 0 : i64, scratch_operands = 0 : i64, tpu.core_type = #tpu.core_type<tc>} {
    %c0 = arith.constant 0 : index
    %c0_0 = arith.constant 0 : index
    %0 = vector.load %arg0[%c0, %c0_0] : memref<8x32xf32, #tpu.memory_space<vmem>>, vector<8x32xf32>
    %c0_1 = arith.constant 0 : index
    %c0_2 = arith.constant 0 : index
    %c0_3 = arith.constant 0 : index
    %1 = vector.load %arg4[%c0_1, %c0_2, %c0_3] : memref<2x32x32xf32, #tpu.memory_space<vmem>>, vector<1x32x32xf32>
    %2 = vector.shape_cast %1 : vector<1x32x32xf32> to vector<32x32xf32>
    %c1 = arith.constant 1 : index
    %c0_4 = arith.constant 0 : index
    %c0_5 = arith.constant 0 : index
    %3 = vector.load %arg4[%c1, %c0_4, %c0_5] : memref<2x32x32xf32, #tpu.memory_space<vmem>>, vector<1x32x32xf32>
    %4 = vector.shape_cast %3 : vector<1x32x32xf32> to vector<32x32xf32>
    %c0_6 = arith.constant 0 : index
    %c0_7 = arith.constant 0 : index
    %c0_8 = arith.constant 0 : index
    %5 = vector.load %arg5[%c0_6, %c0_7, %c0_8] : memref<2x1x32xf32, #tpu.memory_space<vmem>>, vector<1x1x32xf32>
    %6 = vector.shape_cast %5 : vector<1x1x32xf32> to vector<1x32xf32>
    %c1_9 = arith.constant 1 : index
    %c0_10 = arith.constant 0 : index
    %c0_11 = arith.constant 0 : index
    %7 = vector.load %arg5[%c1_9, %c0_10, %c0_11] : memref<2x1x32xf32, #tpu.memory_space<vmem>>, vector<1x1x32xf32>
    %8 = vector.shape_cast %7 : vector<1x1x32xf32> to vector<1x32xf32>
    %cst = arith.constant dense<0.000000e+00> : vector<8x32xf32>
    %9 = tpu.matmul %0, %2, %cst {dimension_numbers = #tpu.dot_dimension_numbers<[1], [0], [0], [1], [0, 0, 1, 1], [], []>} : vector<8x32xf32>, vector<32x32xf32>, vector<8x32xf32> -> vector<8x32xf32>
    %10 = vector.broadcast %6 : vector<1x32xf32> to vector<8x32xf32>
    %11 = arith.addf %9, %10 : vector<8x32xf32>
    %cst_12 = arith.constant 0.000000e+00 : f32
    %12 = vector.broadcast %cst_12 : f32 to vector<8x32xf32>
    %13 = arith.maximumf %11, %12 : vector<8x32xf32>
    %cst_13 = arith.constant dense<0.000000e+00> : vector<8x32xf32>
    %14 = tpu.matmul %13, %4, %cst_13 {dimension_numbers = #tpu.dot_dimension_numbers<[1], [0], [0], [1], [0, 0, 1, 1], [], []>} : vector<8x32xf32>, vector<32x32xf32>, vector<8x32xf32> -> vector<8x32xf32>
    %15 = vector.broadcast %8 : vector<1x32xf32> to vector<8x32xf32>
    %16 = arith.addf %14, %15 : vector<8x32xf32>
    %c0_14 = arith.constant 0 : index
    %c0_15 = arith.constant 0 : index
    %17 = vector.load %arg6[%c0_14, %c0_15] : memref<8x32xf32, #tpu.memory_space<vmem>>, vector<8x32xf32>
    tpu.vector_store %arg6[%c0_14, %c0_15], %16 {strides = array<i32>} : memref<8x32xf32, #tpu.memory_space<vmem>>, vector<8x32xf32>,
    %c0_16 = arith.constant 0 : index
    %c0_17 = arith.constant 0 : index
    %18 = vector.load %arg1[%c0_16, %c0_17] : memref<32x256xf32, #tpu.memory_space<vmem>>, vector<32x256xf32>
    %cst_18 = arith.constant dense<0.000000e+00> : vector<8x256xf32>
    %19 = tpu.matmul %0, %18, %cst_18 {dimension_numbers = #tpu.dot_dimension_numbers<[1], [0], [0], [1], [0, 0, 1, 1], [], []>} : vector<8x32xf32>, vector<32x256xf32>, vector<8x256xf32> -> vector<8x256xf32>
    %20 = tpu.iota {dimensions = array<i32: 0>} : vector<8x1xi32>
    %c0_i32 = arith.constant 0 : i32
    %21 = vector.broadcast %c0_i32 : i32 to vector<8x1xi32>
    %22 = arith.cmpi ne, %20, %21 : vector<8x1xi32>
    %23 = vector.extract_strided_slice %0 {offsets = [0, 0], sizes = [1, 32], strides = [1, 1]} : vector<8x32xf32> to vector<1x32xf32>
    %c0_19 = arith.constant 0 : index
    %c0_20 = arith.constant 0 : index
    %c0_21 = arith.constant 0 : index
    %24 = vector.load %arg3[%c0_19, %c0_20, %c0_21] : memref<2x8x128xf32, #tpu.memory_space<vmem>>, vector<1x1x128xf32>
    %25 = vector.shape_cast %24 : vector<1x1x128xf32> to vector<1x128xf32>
    %c0_22 = arith.constant 0 : index
    %c1_23 = arith.constant 1 : index
    %c0_24 = arith.constant 0 : index
    %26 = vector.load %arg3[%c0_22, %c1_23, %c0_24] : memref<2x8x128xf32, #tpu.memory_space<vmem>>, vector<1x1x128xf32>
    %27 = vector.shape_cast %26 : vector<1x1x128xf32> to vector<1x128xf32>
    %c0_25 = arith.constant 0 : index
    %c2 = arith.constant 2 : index
    %c0_26 = arith.constant 0 : index
    %28 = vector.load %arg3[%c0_25, %c2, %c0_26] : memref<2x8x128xf32, #tpu.memory_space<vmem>>, vector<1x1x1xf32>
    %29 = vector.shape_cast %28 : vector<1x1x1xf32> to vector<1x1xf32>
    %c0_27 = arith.constant 0 : index
    %c3 = arith.constant 3 : index
    %c0_28 = arith.constant 0 : index
    %30 = vector.load %arg3[%c0_27, %c3, %c0_28] : memref<2x8x128xf32, #tpu.memory_space<vmem>>, vector<1x1x32xf32>
    %31 = vector.shape_cast %30 : vector<1x1x32xf32> to vector<1x32xf32>
    %c0_29 = arith.constant 0 : index
    %c4 = arith.constant 4 : index
    %c0_30 = arith.constant 0 : index
    %32 = vector.load %arg3[%c0_29, %c4, %c0_30] : memref<2x8x128xf32, #tpu.memory_space<vmem>>, vector<1x1x32xf32>
    %33 = vector.shape_cast %32 : vector<1x1x32xf32> to vector<1x32xf32>
    %c0_31 = arith.constant 0 : index
    %c5 = arith.constant 5 : index
    %c0_32 = arith.constant 0 : index
    %34 = vector.load %arg3[%c0_31, %c5, %c0_32] : memref<2x8x128xf32, #tpu.memory_space<vmem>>, vector<1x1x32xf32>
    %35 = vector.shape_cast %34 : vector<1x1x32xf32> to vector<1x32xf32>
    %c0_33 = arith.constant 0 : index
    %c0_34 = arith.constant 0 : index
    %c0_35 = arith.constant 0 : index
    %36 = vector.load %arg2[%c0_33, %c0_34, %c0_35] : memref<2x32x768xf32, #tpu.memory_space<vmem>>, vector<1x32x384xf32>
    %37 = vector.shape_cast %36 : vector<1x32x384xf32> to vector<32x384xf32>
    %cst_36 = arith.constant dense<0.000000e+00> : vector<1x384xf32>
    %38 = tpu.matmul %23, %37, %cst_36 {dimension_numbers = #tpu.dot_dimension_numbers<[1], [0], [0], [1], [0, 0, 1, 1], [], []>} : vector<1x32xf32>, vector<32x384xf32>, vector<1x384xf32> -> vector<1x384xf32>
    %39 = vector.extract_strided_slice %38 {offsets = [0, 0], sizes = [1, 128], strides = [1, 1]} : vector<1x384xf32> to vector<1x128xf32>
    %40 = vector.extract_strided_slice %38 {offsets = [0, 128], sizes = [1, 32], strides = [1, 1]} : vector<1x384xf32> to vector<1x32xf32>
    %41 = vector.extract_strided_slice %38 {offsets = [0, 256], sizes = [1, 32], strides = [1, 1]} : vector<1x384xf32> to vector<1x32xf32>
    %42 = arith.addf %39, %25 : vector<1x128xf32>
    %43 = vector.extract_strided_slice %19 {offsets = [0, 0], sizes = [8, 128], strides = [1, 1]} : vector<8x256xf32> to vector<8x128xf32>
    %44 = vector.broadcast %42 : vector<1x128xf32> to vector<8x128xf32>
    %45 = arith.addf %44, %43 : vector<8x128xf32>
    %cst_37 = arith.constant 0.000000e+00 : f32
    %46 = vector.broadcast %cst_37 : f32 to vector<8x128xf32>
    %47 = arith.maximumf %45, %46 : vector<8x128xf32>
    %48 = vector.broadcast %27 : vector<1x128xf32> to vector<8x128xf32>
    %49 = arith.mulf %47, %48 : vector<8x128xf32>
    %cst_38 = arith.constant dense<0.000000e+00> : vector<8xf32>
    %50 = vector.multi_reduction <add>, %49, %cst_38 [1] : vector<8x128xf32> to vector<8xf32>
    %51 = vector.shape_cast %50 : vector<8xf32> to vector<8x1xf32>
    %52 = vector.broadcast %29 : vector<1x1xf32> to vector<8x1xf32>
    %53 = arith.addf %51, %52 : vector<8x1xf32>
    %54 = arith.negf %53 : vector<8x1xf32>
    %55 = math.exp %54 : vector<8x1xf32>
    %cst_39 = arith.constant 1.000000e+00 : f32
    %56 = vector.broadcast %cst_39 : f32 to vector<8x1xf32>
    %57 = arith.addf %56, %55 : vector<8x1xf32>
    %58 = arith.divf %56, %57 : vector<8x1xf32>
    %cst_40 = arith.constant 0.000000e+00 : f32
    %59 = vector.broadcast %cst_40 : f32 to vector<8x1xf32>
    %60 = arith.select %22, %58, %59 : vector<8x1xi1>, vector<8x1xf32>
    %61 = vector.shape_cast %60 : vector<8x1xf32> to vector<1x8x1xf32>
    %cst_41 = arith.constant dense<0.000000e+00> : vector<1xf32>
    %62 = vector.multi_reduction <add>, %61, %cst_41 [1, 2] : vector<1x8x1xf32> to vector<1xf32>
    %63 = vector.shape_cast %62 : vector<1xf32> to vector<1x1x1xf32>
    %64 = vector.extract %63[0, 0, 0] : f32 from vector<1x1x1xf32>
    %cst_42 = arith.constant 0.000000e+00 : f32
    %65 = arith.cmpf ogt, %64, %cst_42 : f32
    %66 = vector.broadcast %64 : f32 to vector<8x1xf32>
    %67 = arith.divf %60, %66 : vector<8x1xf32>
    %68 = arith.select %65, %67, %60 : vector<8x1xf32>
    %69 = vector.broadcast %68 : vector<8x1xf32> to vector<8x32xf32>
    %70 = arith.mulf %0, %69 : vector<8x32xf32>
    %cst_43 = arith.constant dense<0.000000e+00> : vector<32xf32>
    %71 = vector.multi_reduction <add>, %70, %cst_43 [0] : vector<8x32xf32> to vector<32xf32>
    %72 = vector.shape_cast %71 : vector<32xf32> to vector<1x32xf32>
    %c0_44 = arith.constant 0 : index
    %c0_45 = arith.constant 0 : index
    %c384 = arith.constant 384 : index
    %73 = vector.load %arg2[%c0_44, %c0_45, %c384] : memref<2x32x768xf32, #tpu.memory_space<vmem>>, vector<1x32x256xf32>
    %74 = vector.shape_cast %73 : vector<1x32x256xf32> to vector<32x256xf32>
    %cst_46 = arith.constant dense<0.000000e+00> : vector<1x256xf32>
    %75 = tpu.matmul %72, %74, %cst_46 {dimension_numbers = #tpu.dot_dimension_numbers<[1], [0], [0], [1], [0, 0, 1, 1], [], []>} : vector<1x32xf32>, vector<32x256xf32>, vector<1x256xf32> -> vector<1x256xf32>
    %76 = vector.extract_strided_slice %75 {offsets = [0, 0], sizes = [1, 32], strides = [1, 1]} : vector<1x256xf32> to vector<1x32xf32>
    %77 = vector.extract_strided_slice %75 {offsets = [0, 128], sizes = [1, 32], strides = [1, 1]} : vector<1x256xf32> to vector<1x32xf32>
    %78 = arith.addf %40, %76 : vector<1x32xf32>
    %79 = arith.addf %78, %31 : vector<1x32xf32>
    %80 = arith.negf %79 : vector<1x32xf32>
    %81 = math.exp %80 : vector<1x32xf32>
    %cst_47 = arith.constant 1.000000e+00 : f32
    %82 = vector.broadcast %cst_47 : f32 to vector<1x32xf32>
    %83 = arith.addf %82, %81 : vector<1x32xf32>
    %84 = arith.divf %82, %83 : vector<1x32xf32>
    %85 = arith.addf %41, %77 : vector<1x32xf32>
    %86 = arith.addf %85, %33 : vector<1x32xf32>
    %cst_48 = arith.constant 0.000000e+00 : f32
    %87 = vector.broadcast %cst_48 : f32 to vector<1x32xf32>
    %88 = arith.maximumf %86, %87 : vector<1x32xf32>
    %c0_49 = arith.constant 0 : index
    %c0_50 = arith.constant 0 : index
    %c640 = arith.constant 640 : index
    %89 = vector.load %arg2[%c0_49, %c0_50, %c640] : memref<2x32x768xf32, #tpu.memory_space<vmem>>, vector<1x32x128xf32>
    %90 = vector.shape_cast %89 : vector<1x32x128xf32> to vector<32x128xf32>
    %cst_51 = arith.constant dense<0.000000e+00> : vector<1x128xf32>
    %91 = tpu.matmul %88, %90, %cst_51 {dimension_numbers = #tpu.dot_dimension_numbers<[1], [0], [0], [1], [0, 0, 1, 1], [], []>} : vector<1x32xf32>, vector<32x128xf32>, vector<1x128xf32> -> vector<1x128xf32>
    %92 = vector.extract_strided_slice %91 {offsets = [0, 0], sizes = [1, 32], strides = [1, 1]} : vector<1x128xf32> to vector<1x32xf32>
    %93 = arith.addf %92, %35 : vector<1x32xf32>
    %94 = arith.mulf %84, %93 : vector<1x32xf32>
    %95 = arith.addf %23, %94 : vector<1x32xf32>
    %c1_52 = arith.constant 1 : index
    %c0_53 = arith.constant 0 : index
    %c0_54 = arith.constant 0 : index
    %96 = vector.load %arg3[%c1_52, %c0_53, %c0_54] : memref<2x8x128xf32, #tpu.memory_space<vmem>>, vector<1x1x128xf32>
    %97 = vector.shape_cast %96 : vector<1x1x128xf32> to vector<1x128xf32>
    %c1_55 = arith.constant 1 : index
    %c1_56 = arith.constant 1 : index
    %c0_57 = arith.constant 0 : index
    %98 = vector.load %arg3[%c1_55, %c1_56, %c0_57] : memref<2x8x128xf32, #tpu.memory_space<vmem>>, vector<1x1x128xf32>
    %99 = vector.shape_cast %98 : vector<1x1x128xf32> to vector<1x128xf32>
    %c1_58 = arith.constant 1 : index
    %c2_59 = arith.constant 2 : index
    %c0_60 = arith.constant 0 : index
    %100 = vector.load %arg3[%c1_58, %c2_59, %c0_60] : memref<2x8x128xf32, #tpu.memory_space<vmem>>, vector<1x1x1xf32>
    %101 = vector.shape_cast %100 : vector<1x1x1xf32> to vector<1x1xf32>
    %c1_61 = arith.constant 1 : index
    %c3_62 = arith.constant 3 : index
    %c0_63 = arith.constant 0 : index
    %102 = vector.load %arg3[%c1_61, %c3_62, %c0_63] : memref<2x8x128xf32, #tpu.memory_space<vmem>>, vector<1x1x32xf32>
    %103 = vector.shape_cast %102 : vector<1x1x32xf32> to vector<1x32xf32>
    %c1_64 = arith.constant 1 : index
    %c4_65 = arith.constant 4 : index
    %c0_66 = arith.constant 0 : index
    %104 = vector.load %arg3[%c1_64, %c4_65, %c0_66] : memref<2x8x128xf32, #tpu.memory_space<vmem>>, vector<1x1x32xf32>
    %105 = vector.shape_cast %104 : vector<1x1x32xf32> to vector<1x32xf32>
    %c1_67 = arith.constant 1 : index
    %c5_68 = arith.constant 5 : index
    %c0_69 = arith.constant 0 : index
    %106 = vector.load %arg3[%c1_67, %c5_68, %c0_69] : memref<2x8x128xf32, #tpu.memory_space<vmem>>, vector<1x1x32xf32>
    %107 = vector.shape_cast %106 : vector<1x1x32xf32> to vector<1x32xf32>
    %c1_70 = arith.constant 1 : index
    %c0_71 = arith.constant 0 : index
    %c0_72 = arith.constant 0 : index
    %108 = vector.load %arg2[%c1_70, %c0_71, %c0_72] : memref<2x32x768xf32, #tpu.memory_space<vmem>>, vector<1x32x384xf32>
    %109 = vector.shape_cast %108 : vector<1x32x384xf32> to vector<32x384xf32>
    %cst_73 = arith.constant dense<0.000000e+00> : vector<1x384xf32>
    %110 = tpu.matmul %95, %109, %cst_73 {dimension_numbers = #tpu.dot_dimension_numbers<[1], [0], [0], [1], [0, 0, 1, 1], [], []>} : vector<1x32xf32>, vector<32x384xf32>, vector<1x384xf32> -> vector<1x384xf32>
    %111 = vector.extract_strided_slice %110 {offsets = [0, 0], sizes = [1, 128], strides = [1, 1]} : vector<1x384xf32> to vector<1x128xf32>
    %112 = vector.extract_strided_slice %110 {offsets = [0, 128], sizes = [1, 32], strides = [1, 1]} : vector<1x384xf32> to vector<1x32xf32>
    %113 = vector.extract_strided_slice %110 {offsets = [0, 256], sizes = [1, 32], strides = [1, 1]} : vector<1x384xf32> to vector<1x32xf32>
    %114 = arith.addf %111, %97 : vector<1x128xf32>
    %115 = vector.extract_strided_slice %19 {offsets = [0, 128], sizes = [8, 128], strides = [1, 1]} : vector<8x256xf32> to vector<8x128xf32>
    %116 = vector.broadcast %114 : vector<1x128xf32> to vector<8x128xf32>
    %117 = arith.addf %116, %115 : vector<8x128xf32>
    %cst_74 = arith.constant 0.000000e+00 : f32
    %118 = vector.broadcast %cst_74 : f32 to vector<8x128xf32>
    %119 = arith.maximumf %117, %118 : vector<8x128xf32>
    %120 = vector.broadcast %99 : vector<1x128xf32> to vector<8x128xf32>
    %121 = arith.mulf %119, %120 : vector<8x128xf32>
    %cst_75 = arith.constant dense<0.000000e+00> : vector<8xf32>
    %122 = vector.multi_reduction <add>, %121, %cst_75 [1] : vector<8x128xf32> to vector<8xf32>
    %123 = vector.shape_cast %122 : vector<8xf32> to vector<8x1xf32>
    %124 = vector.broadcast %101 : vector<1x1xf32> to vector<8x1xf32>
    %125 = arith.addf %123, %124 : vector<8x1xf32>
    %126 = arith.negf %125 : vector<8x1xf32>
    %127 = math.exp %126 : vector<8x1xf32>
    %cst_76 = arith.constant 1.000000e+00 : f32
    %128 = vector.broadcast %cst_76 : f32 to vector<8x1xf32>
    %129 = arith.addf %128, %127 : vector<8x1xf32>
    %130 = arith.divf %128, %129 : vector<8x1xf32>
    %cst_77 = arith.constant 0.000000e+00 : f32
    %131 = vector.broadcast %cst_77 : f32 to vector<8x1xf32>
    %132 = arith.select %22, %130, %131 : vector<8x1xi1>, vector<8x1xf32>
    %133 = vector.shape_cast %132 : vector<8x1xf32> to vector<1x8x1xf32>
    %cst_78 = arith.constant dense<0.000000e+00> : vector<1xf32>
    %134 = vector.multi_reduction <add>, %133, %cst_78 [1, 2] : vector<1x8x1xf32> to vector<1xf32>
    %135 = vector.shape_cast %134 : vector<1xf32> to vector<1x1x1xf32>
    %136 = vector.extract %135[0, 0, 0] : f32 from vector<1x1x1xf32>
    %cst_79 = arith.constant 0.000000e+00 : f32
    %137 = arith.cmpf ogt, %136, %cst_79 : f32
    %138 = vector.broadcast %136 : f32 to vector<8x1xf32>
    %139 = arith.divf %132, %138 : vector<8x1xf32>
    %140 = arith.select %137, %139, %132 : vector<8x1xf32>
    %141 = vector.broadcast %140 : vector<8x1xf32> to vector<8x32xf32>
    %142 = arith.mulf %0, %141 : vector<8x32xf32>
    %cst_80 = arith.constant dense<0.000000e+00> : vector<32xf32>
    %143 = vector.multi_reduction <add>, %142, %cst_80 [0] : vector<8x32xf32> to vector<32xf32>
    %144 = vector.shape_cast %143 : vector<32xf32> to vector<1x32xf32>
    %c1_81 = arith.constant 1 : index
    %c0_82 = arith.constant 0 : index
    %c384_83 = arith.constant 384 : index
    %145 = vector.load %arg2[%c1_81, %c0_82, %c384_83] : memref<2x32x768xf32, #tpu.memory_space<vmem>>, vector<1x32x256xf32>
    %146 = vector.shape_cast %145 : vector<1x32x256xf32> to vector<32x256xf32>
    %cst_84 = arith.constant dense<0.000000e+00> : vector<1x256xf32>
    %147 = tpu.matmul %144, %146, %cst_84 {dimension_numbers = #tpu.dot_dimension_numbers<[1], [0], [0], [1], [0, 0, 1, 1], [], []>} : vector<1x32xf32>, vector<32x256xf32>, vector<1x256xf32> -> vector<1x256xf32>
    %148 = vector.extract_strided_slice %147 {offsets = [0, 0], sizes = [1, 32], strides = [1, 1]} : vector<1x256xf32> to vector<1x32xf32>
    %149 = vector.extract_strided_slice %147 {offsets = [0, 128], sizes = [1, 32], strides = [1, 1]} : vector<1x256xf32> to vector<1x32xf32>
    %150 = arith.addf %112, %148 : vector<1x32xf32>
    %151 = arith.addf %150, %103 : vector<1x32xf32>
    %152 = arith.negf %151 : vector<1x32xf32>
    %153 = math.exp %152 : vector<1x32xf32>
    %cst_85 = arith.constant 1.000000e+00 : f32
    %154 = vector.broadcast %cst_85 : f32 to vector<1x32xf32>
    %155 = arith.addf %154, %153 : vector<1x32xf32>
    %156 = arith.divf %154, %155 : vector<1x32xf32>
    %157 = arith.addf %113, %149 : vector<1x32xf32>
    %158 = arith.addf %157, %105 : vector<1x32xf32>
    %cst_86 = arith.constant 0.000000e+00 : f32
    %159 = vector.broadcast %cst_86 : f32 to vector<1x32xf32>
    %160 = arith.maximumf %158, %159 : vector<1x32xf32>
    %c1_87 = arith.constant 1 : index
    %c0_88 = arith.constant 0 : index
    %c640_89 = arith.constant 640 : index
    %161 = vector.load %arg2[%c1_87, %c0_88, %c640_89] : memref<2x32x768xf32, #tpu.memory_space<vmem>>, vector<1x32x128xf32>
    %162 = vector.shape_cast %161 : vector<1x32x128xf32> to vector<32x128xf32>
    %cst_90 = arith.constant dense<0.000000e+00> : vector<1x128xf32>
    %163 = tpu.matmul %160, %162, %cst_90 {dimension_numbers = #tpu.dot_dimension_numbers<[1], [0], [0], [1], [0, 0, 1, 1], [], []>} : vector<1x32xf32>, vector<32x128xf32>, vector<1x128xf32> -> vector<1x128xf32>
    %164 = vector.extract_strided_slice %163 {offsets = [0, 0], sizes = [1, 32], strides = [1, 1]} : vector<1x128xf32> to vector<1x32xf32>
    %165 = arith.addf %164, %107 : vector<1x32xf32>
    %166 = arith.mulf %156, %165 : vector<1x32xf32>
    %167 = arith.addf %95, %166 : vector<1x32xf32>
    %cst_91 = arith.constant dense<0.000000e+00> : vector<1x32xf32>
    %168 = tpu.matmul %167, %2, %cst_91 {dimension_numbers = #tpu.dot_dimension_numbers<[1], [0], [0], [1], [0, 0, 1, 1], [], []>} : vector<1x32xf32>, vector<32x32xf32>, vector<1x32xf32> -> vector<1x32xf32>
    %169 = arith.addf %168, %6 : vector<1x32xf32>
    %cst_92 = arith.constant 0.000000e+00 : f32
    %170 = vector.broadcast %cst_92 : f32 to vector<1x32xf32>
    %171 = arith.maximumf %169, %170 : vector<1x32xf32>
    %cst_93 = arith.constant dense<0.000000e+00> : vector<1x32xf32>
    %172 = tpu.matmul %171, %4, %cst_93 {dimension_numbers = #tpu.dot_dimension_numbers<[1], [0], [0], [1], [0, 0, 1, 1], [], []>} : vector<1x32xf32>, vector<32x32xf32>, vector<1x32xf32> -> vector<1x32xf32>
    %173 = arith.addf %172, %8 : vector<1x32xf32>
    %c0_94 = arith.constant 0 : index
    %c0_95 = arith.constant 0 : index
    %174 = vector.load %arg6[%c0_94, %c0_95] : memref<8x32xf32, #tpu.memory_space<vmem>>, vector<1x32xf32>
    tpu.vector_store %arg6[%c0_94, %c0_95], %173 {strides = array<i32>} : memref<8x32xf32, #tpu.memory_space<vmem>>, vector<1x32xf32>,
    return
  }
}

</mosaic_0001>

<llo_original>
// kernel: tpu_custom_call.1
$region0: #{tpu_custom_call.1}
  #allocation0 [shape = 'u32[]', space=smem, size = 0x4, offset = 0x4, fixed_abs, tag = 'smem constant byte address 0x4 - core index']
  #allocation1 [shape = 'u32[72,128]{1,0:T(1,128)}', space=vmem, size = 0x9000, scoped, tag = 'internal scratch']
  %s0 = inlined_call_operand.hbm [shape: f32[8,32], index: 0, kind: input, shape index: {}]
  %s1 = inlined_call_operand.hbm [shape: f32[32,256], index: 1, kind: input, shape index: {}]
  %s2 = inlined_call_operand.hbm [shape: f32[2,32,768], index: 2, kind: input, shape index: {}]
  %s3 = inlined_call_operand.hbm [shape: f32[2,8,128], index: 3, kind: input, shape index: {}]
  %s4 = inlined_call_operand.hbm [shape: f32[2,32,32], index: 4, kind: input, shape index: {}]
  %s5 = inlined_call_operand.vmem [shape: f32[2,1,32], index: 5, kind: input, shape index: {}]
  %s6 = inlined_call_operand.hbm [shape: f32[8,32], index: 6, kind: output, shape index: {}]
  %s7 = sld [smem:[#allocation0]]
  $region54: #{tpu_custom_call.1} parent=0
    _
  %s9 = ssub.s32 1, %s7
  %s10 = scalar_select 0, %s9, %s7
  $region1: #{tpu_custom_call.1} parent=0
    #allocation2 [shape = 'u8[4096]{0}', space=vmem, size = 0x1000, scoped, tag = 'input window, operand 0, single buffered']
    #allocation3 [shape = 's32[1]{0}', space=sflag, size = 0x4, scoped, tag = 'scoped memory for tpu_custom_call.1']
    #allocation4 [shape = 's32[1]{0}', space=sflag, size = 0x4, scoped, tag = 'scoped memory for tpu_custom_call.1']
    #allocation5 [shape = 'u8[32768]{0}', space=vmem, size = 0x8000, scoped, tag = 'input window, operand 1, single buffered']
    #allocation6 [shape = 's32[1]{0}', space=sflag, size = 0x4, scoped, tag = 'scoped memory for tpu_custom_call.1']
    #allocation7 [shape = 'u8[196608]{0}', space=vmem, size = 0x30000, scoped, tag = 'input window, operand 2, single buffered']
    #allocation8 [shape = 'u8[8192]{0}', space=vmem, size = 0x2000, scoped, tag = 'input window, operand 3, single buffered']
    #allocation9 [shape = 's32[1]{0}', space=sflag, size = 0x4, scoped, tag = 'scoped memory for tpu_custom_call.1']
    #allocation10 [shape = 'u8[32768]{0}', space=vmem, size = 0x8000, scoped, tag = 'input window, operand 4, single buffered']
    #allocation11 [shape = 'u8[4096]{0}', space=vmem, size = 0x1000, scoped, tag = 'output window, operand 0, single buffered']
    %11 = vsyncpa [#allocation3], 0
    %12 = vsyncpa [#allocation6], 0
    %13 = vsyncpa [#allocation9], 0
    %14 = vsyncpa [#allocation4], 0
    // Predicated region
    $region2: #{tpu_custom_call.1} parent=1 // pred_check
      _
    $region3: #{tpu_custom_call.1} parent=1 // pred_check_branch
      %16 = sbr.rel (0) target = $region5
    $region4: #{tpu_custom_call.1} parent=1 // pred_region
      %18 = vsyncadd [#allocation3], 0
      %s20 = sshll.u32 %s0, 4
      %s21 = int_to_ptr.hbm [resolvable:$true] %s20
      %s22 = sshll.u32 [#allocation2], 4
      %s23 = int_to_ptr.vmem [resolvable:$true] %s22
      %25 = dma.hbm_to_vmem [thread:$0]  %s21, 128, %s23, [#allocation3]
    $region5: #{tpu_custom_call.1} parent=1 // pred_fallthru
      _
    // Predicated region
    $region6: #{tpu_custom_call.1} parent=1 // pred_check
      _
    $region7: #{tpu_custom_call.1} parent=1 // pred_check_branch
      %27 = sbr.rel (0) target = $region9
    $region8: #{tpu_custom_call.1} parent=1 // pred_region
      %29 = vsyncadd [#allocation6], 0
      %s30 = sshll.u32 %s1, 4
      %s31 = int_to_ptr.hbm [resolvable:$true] %s30
      %s32 = sshll.u32 [#allocation5], 4
      %s33 = int_to_ptr.vmem [resolvable:$true] %s32
      %38 = dma.hbm_to_vmem [thread:$0]  %s31, 1024, %s33, [#allocation6], 256, 256, 16
    $region9: #{tpu_custom_call.1} parent=1 // pred_fallthru
      _
    // Predicated region
    $region10: #{tpu_custom_call.1} parent=1 // pred_check
      _
    $region11: #{tpu_custom_call.1} parent=1 // pred_check_branch
      %40 = sbr.rel (0) target = $region13
    $region12: #{tpu_custom_call.1} parent=1 // pred_region
      %42 = vsyncadd [#allocation6], 0
      %s43 = sshll.u32 %s2, 4
      %s44 = int_to_ptr.hbm [resolvable:$true] %s43
      %s45 = sshll.u32 [#allocation7], 4
      %s46 = int_to_ptr.vmem [resolvable:$true] %s45
      %51 = dma.hbm_to_vmem [thread:$0]  %s44, 6144, %s46, [#allocation6], 768, 768, 48
    $region13: #{tpu_custom_call.1} parent=1 // pred_fallthru
      _
    // Predicated region
    $region14: #{tpu_custom_call.1} parent=1 // pred_check
      _
    $region15: #{tpu_custom_call.1} parent=1 // pred_check_branch
      %53 = sbr.rel (0) target = $region17
    $region16: #{tpu_custom_call.1} parent=1 // pred_region
      %55 = vsyncadd [#allocation9], 0
      %s56 = sshll.u32 %s3, 4
      %s57 = int_to_ptr.hbm [resolvable:$true] %s56
      %s58 = sshll.u32 [#allocation8], 4
      %s59 = int_to_ptr.vmem [resolvable:$true] %s58
      %64 = dma.hbm_to_vmem [thread:$0]  %s57, 256, %s59, [#allocation9], 128, 128, 8
    $region17: #{tpu_custom_call.1} parent=1 // pred_fallthru
      _
    // Predicated region
    $region18: #{tpu_custom_call.1} parent=1 // pred_check
      _
    $region19: #{tpu_custom_call.1} parent=1 // pred_check_branch
      %66 = sbr.rel (0) target = $region21
    $region20: #{tpu_custom_call.1} parent=1 // pred_region
      %68 = vsyncadd [#allocation9], 0
      %s69 = sshll.u32 %s4, 4
      %s70 = int_to_ptr.hbm [resolvable:$true] %s69
      %s71 = sshll.u32 [#allocation10], 4
      %s72 = int_to_ptr.vmem [resolvable:$true] %s71
      %77 = dma.hbm_to_vmem [thread:$0]  %s70, 1024, %s72, [#allocation9], 128, 128, 8
    $region21: #{tpu_custom_call.1} parent=1 // pred_fallthru
      _
    // Predicated region
    $region22: #{tpu_custom_call.1} parent=1 // pred_check
      _
    $region23: #{tpu_custom_call.1} parent=1 // pred_check_branch
      %79 = sbr.rel (0) target = $region25
    $region24: #{tpu_custom_call.1} parent=1 // pred_region
      _
    $region25: #{tpu_custom_call.1} parent=1 // pred_fallthru
      _
    // Predicated region
    $region26: #{tpu_custom_call.1} parent=1 // pred_check
      _
    $region27: #{tpu_custom_call.1} parent=1 // pred_check_branch
      %81 = sbr.rel (0) target = $region29
    $region28: #{tpu_custom_call.1} parent=1 // pred_region
      %83 = dma.done [#allocation3], 128
    $region29: #{tpu_custom_call.1} parent=1 // pred_fallthru
      _
    // Predicated region
    $region30: #{tpu_custom_call.1} parent=1 // pred_check
      _
    $region31: #{tpu_custom_call.1} parent=1 // pred_check_branch
      %85 = sbr.rel (0) target = $region33
    $region32: #{tpu_custom_call.1} parent=1 // pred_region
      %87 = dma.done [#allocation6], 1024
    $region33: #{tpu_custom_call.1} parent=1 // pred_fallthru
      _
    // Predicated region
    $region34: #{tpu_custom_call.1} parent=1 // pred_check
      _
    $region35: #{tpu_custom_call.1} parent=1 // pred_check_branch
      %89 = sbr.rel (0) target = $region37
    $region36: #{tpu_custom_call.1} parent=1 // pred_region
      %91 = dma.done [#allocation6], 6144
    $region37: #{tpu_custom_call.1} parent=1 // pred_fallthru
      _
    // Predicated region
    $region38: #{tpu_custom_call.1} parent=1 // pred_check
      _
    $region39: #{tpu_custom_call.1} parent=1 // pred_check_branch
      %93 = sbr.rel (0) target = $region41
    $region40: #{tpu_custom_call.1} parent=1 // pred_region
      %95 = dma.done [#allocation9], 256
    $region41: #{tpu_custom_call.1} parent=1 // pred_fallthru
      _
    // Predicated region
    $region42: #{tpu_custom_call.1} parent=1 // pred_check
      _
    $region43: #{tpu_custom_call.1} parent=1 // pred_check_branch
      %97 = sbr.rel (0) target = $region45
    $region44: #{tpu_custom_call.1} parent=1 // pred_region
      %99 = dma.done [#allocation9], 1024
    $region45: #{tpu_custom_call.1} parent=1 // pred_fallthru
      _
    %v100 = vld [vmem:[#allocation2] sm:$0xff]
    %v101 = vld [vmem:[#allocation10] sm:$0xff]
    %v102 = vld [vmem:[#allocation10 + $0x8] sm:$0xff]
    %v103 = vld [vmem:[#allocation10 + $0x10] sm:$0xff]
    %v104 = vld [vmem:[#allocation10 + $0x18] sm:$0xff]
    %s105 = scalar_lea.vmem [#allocation10], 32
    %v106 = vld [vmem:[%s105] sm:$0xff]
    %v107 = vld [vmem:[%s105 + $0x8] sm:$0xff]
    %v108 = vld [vmem:[%s105 + $0x10] sm:$0xff]
    %v109 = vld [vmem:[%s105 + $0x18] sm:$0xff]
    %v110 = vld [vmem:[%s5] sm:$0x1]
    %s111 = scalar_lea.vmem %s5, 1
    %v112 = vld [vmem:[%s111] sm:$0x1]
    %v114 = vperm.slane %v110, 0
    %vm116 = vcmask 261120
    %v118 = vsel %vm116, %v100, 0
    %120 = vmatpush.msra.mxu0 0.0
    %121 = vmatpush.msra.mxu0 0.0
    %122 = vmatpush.msra.mxu0 0.0
    %123 = vmatpush.msra.mxu0 0.0
    %124 = vmatpush.msra.mxu0 0.0
    %125 = vmatpush.msra.mxu0 0.0
    %126 = vmatpush.msra.mxu0 0.0
    %127 = vmatpush.msra.mxu0 0.0
    %128 = vmatpush.msra.mxu0 0.0
    %129 = vmatpush.msra.mxu0 0.0
    %130 = vmatpush.msra.mxu0 0.0
    %131 = vmatpush.msra.mxu0 0.0
    %132 = vmatpush.msra.mxu0 %v104
    %133 = vmatpush.msra.mxu0 %v103
    %134 = vmatpush.msra.mxu0 %v102
    %135 = vmatpush.msra.mxu0 %v101
    %136 = vmatmul.f32.gmra.mxu0 %v118
    %v137 = vpop.f32.mrf.mxu0
    %v138 = vadd.f32 %v114, %v137
    %139 = vdwg.mxu0
    %v140 = vmax.f32 %v138, 0.0
    %v142 = vperm.slane %v112, 0
    %v145 = vsel %vm116, %v140, 0
    %147 = vmatpush.msra.mxu0 0.0
    %148 = vmatpush.msra.mxu0 0.0
    %149 = vmatpush.msra.mxu0 0.0
    %150 = vmatpush.msra.mxu0 0.0
    %151 = vmatpush.msra.mxu0 0.0
    %152 = vmatpush.msra.mxu0 0.0
    %153 = vmatpush.msra.mxu0 0.0
    %154 = vmatpush.msra.mxu0 0.0
    %155 = vmatpush.msra.mxu0 0.0
    %156 = vmatpush.msra.mxu0 0.0
    %157 = vmatpush.msra.mxu0 0.0
    %158 = vmatpush.msra.mxu0 0.0
    %159 = vmatpush.msra.mxu0 %v109
    %160 = vmatpush.msra.mxu0 %v108
    %161 = vmatpush.msra.mxu0 %v107
    %162 = vmatpush.msra.mxu0 %v106
    %163 = vmatmul.f32.gmra.mxu0 %v145
    %v164 = vpop.f32.mrf.mxu0
    %v165 = vadd.f32 %v142, %v164
    %166 = vdwg.mxu0
    %167 = vst.msk [vmem:[#allocation11] sm:$0xff] %vm116, %v165
    %v168 = vld [vmem:[#allocation5] sm:$0xff]
    %v169 = vld [vmem:[#allocation5 + $0x8] sm:$0xff]
    %v170 = vld [vmem:[#allocation5 + $0x10] sm:$0xff]
    %v171 = vld [vmem:[#allocation5 + $0x18] sm:$0xff]
    %v172 = vld [vmem:[#allocation5 + $0x20] sm:$0xff]
    %v173 = vld [vmem:[#allocation5 + $0x28] sm:$0xff]
    %v174 = vld [vmem:[#allocation5 + $0x30] sm:$0xff]
    %v175 = vld [vmem:[#allocation5 + $0x38] sm:$0xff]
    %176 = vmatpush.msra.mxu0 0.0
    %177 = vmatpush.msra.mxu0 0.0
    %178 = vmatpush.msra.mxu0 0.0
    %179 = vmatpush.msra.mxu0 0.0
    %180 = vmatpush.msra.mxu0 0.0
    %181 = vmatpush.msra.mxu0 0.0
    %182 = vmatpush.msra.mxu0 0.0
    %183 = vmatpush.msra.mxu0 0.0
    %184 = vmatpush.msra.mxu0 0.0
    %185 = vmatpush.msra.mxu0 0.0
    %186 = vmatpush.msra.mxu0 0.0
    %187 = vmatpush.msra.mxu0 0.0
    %188 = vmatpush.msra.mxu0 %v174
    %189 = vmatpush.msra.mxu0 %v172
    %190 = vmatpush.msra.mxu0 %v170
    %191 = vmatpush.msra.mxu0 %v168
    %192 = vmatmul.f32.gmra.mxu0 %v118
    %v193 = vpop.f32.mrf.mxu0
    %v194 = vadd.f32 0.0, %v193
    %195 = vdwg.mxu0
    %196 = vmatpush.msra.mxu0 0.0
    %197 = vmatpush.msra.mxu0 0.0
    %198 = vmatpush.msra.mxu0 0.0
    %199 = vmatpush.msra.mxu0 0.0
    %200 = vmatpush.msra.mxu0 0.0
    %201 = vmatpush.msra.mxu0 0.0
    %202 = vmatpush.msra.mxu0 0.0
    %203 = vmatpush.msra.mxu0 0.0
    %204 = vmatpush.msra.mxu0 0.0
    %205 = vmatpush.msra.mxu0 0.0
    %206 = vmatpush.msra.mxu0 0.0
    %207 = vmatpush.msra.mxu0 0.0
    %208 = vmatpush.msra.mxu0 %v175
    %209 = vmatpush.msra.mxu0 %v173
    %210 = vmatpush.msra.mxu0 %v171
    %211 = vmatpush.msra.mxu0 %v169
    %212 = vmatmul.f32.gmra.mxu0 %v118
    %v213 = vpop.f32.mrf.mxu0
    %v214 = vadd.f32 0.0, %v213
    %215 = vdwg.mxu0
    %v216 = vlaneseq
    %v217 = vshrl.u32 %v216, 7
    %vm218 = vcmp.ne.s32.totalorder %v217, 0
    %v219 = vld [vmem:[#allocation8] sm:$0x1]
    %v220 = vld [vmem:[#allocation8 + $0x1] sm:$0x1]
    %v221 = vld [vmem:[#allocation8 + $0x2] sm:$0x1]
    %v222 = vld [vmem:[#allocation8 + $0x3] sm:$0x1]
    %v223 = vld [vmem:[#allocation8 + $0x4] sm:$0x1]
    %v224 = vld [vmem:[#allocation8 + $0x5] sm:$0x1]
    %v225 = vld [vmem:[#allocation7] sm:$0xff]
    %v226 = vld [vmem:[#allocation7 + $0x8] sm:$0xff]
    %v227 = vld [vmem:[#allocation7 + $0x10] sm:$0xff]
    %v228 = vld [vmem:[#allocation7 + $0x30] sm:$0xff]
    %v229 = vld [vmem:[#allocation7 + $0x38] sm:$0xff]
    %v230 = vld [vmem:[#allocation7 + $0x40] sm:$0xff]
    %v231 = vld [vmem:[#allocation7 + $0x60] sm:$0xff]
    %v232 = vld [vmem:[#allocation7 + $0x68] sm:$0xff]
    %v233 = vld [vmem:[#allocation7 + $0x70] sm:$0xff]
    %v234 = vld [vmem:[#allocation7 + $0x90] sm:$0xff]
    %v235 = vld [vmem:[#allocation7 + $0x98] sm:$0xff]
    %v236 = vld [vmem:[#allocation7 + $0xa0] sm:$0xff]
    %237 = vmatpush.msra.mxu0 0.0
    %238 = vmatpush.msra.mxu0 0.0
    %239 = vmatpush.msra.mxu0 0.0
    %240 = vmatpush.msra.mxu0 0.0
    %241 = vmatpush.msra.mxu0 0.0
    %242 = vmatpush.msra.mxu0 0.0
    %243 = vmatpush.msra.mxu0 0.0
    %244 = vmatpush.msra.mxu0 0.0
    %245 = vmatpush.msra.mxu0 0.0
    %246 = vmatpush.msra.mxu0 0.0
    %247 = vmatpush.msra.mxu0 0.0
    %248 = vmatpush.msra.mxu0 0.0
    %249 = vmatpush.msra.mxu0 %v234
    %250 = vmatpush.msra.mxu0 %v231
    %251 = vmatpush.msra.mxu0 %v228
    %252 = vmatpush.msra.mxu0 %v225
    %253 = vmatmul.f32.gmra.mxu0 %v118
    %v254 = vpop.f32.mrf.mxu0
    %v255 = vadd.f32 0.0, %v254
    %256 = vdwg.mxu0
    %257 = vmatpush.msra.mxu0 0.0
    %258 = vmatpush.msra.mxu0 0.0
    %259 = vmatpush.msra.mxu0 0.0
    %260 = vmatpush.msra.mxu0 0.0
    %261 = vmatpush.msra.mxu0 0.0
    %262 = vmatpush.msra.mxu0 0.0
    %263 = vmatpush.msra.mxu0 0.0
    %264 = vmatpush.msra.mxu0 0.0
    %265 = vmatpush.msra.mxu0 0.0
    %266 = vmatpush.msra.mxu0 0.0
    %267 = vmatpush.msra.mxu0 0.0
    %268 = vmatpush.msra.mxu0 0.0
    %269 = vmatpush.msra.mxu0 %v235
    %270 = vmatpush.msra.mxu0 %v232
    %271 = vmatpush.msra.mxu0 %v229
    %272 = vmatpush.msra.mxu0 %v226
    %273 = vmatmul.f32.gmra.mxu0 %v118
    %v274 = vpop.f32.mrf.mxu0
    %v275 = vadd.f32 0.0, %v274
    %276 = vdwg.mxu0
    %277 = vmatpush.msra.mxu0 0.0
    %278 = vmatpush.msra.mxu0 0.0
    %279 = vmatpush.msra.mxu0 0.0
    %280 = vmatpush.msra.mxu0 0.0
    %281 = vmatpush.msra.mxu0 0.0
    %282 = vmatpush.msra.mxu0 0.0
    %283 = vmatpush.msra.mxu0 0.0
    %284 = vmatpush.msra.mxu0 0.0
    %285 = vmatpush.msra.mxu0 0.0
    %286 = vmatpush.msra.mxu0 0.0
    %287 = vmatpush.msra.mxu0 0.0
    %288 = vmatpush.msra.mxu0 0.0
    %289 = vmatpush.msra.mxu0 %v236
    %290 = vmatpush.msra.mxu0 %v233
    %291 = vmatpush.msra.mxu0 %v230
    %292 = vmatpush.msra.mxu0 %v227
    %293 = vmatmul.f32.gmra.mxu0 %v118
    %v294 = vpop.f32.mrf.mxu0
    %v295 = vadd.f32 0.0, %v294
    %296 = vdwg.mxu0
    %v297 = vadd.f32 %v255, %v219
    %v298 = vperm.slane %v297, 0
    %v299 = vadd.f32 %v298, %v194
    %v300 = vmax.f32 %v299, 0.0
    %v301 = vperm.slane %v220, 0
    %v302 = vmul.f32 %v300, %v301
    %303 = vadd.xlane.f32.xlu0 %v302
    %v304 = vpop.xlane.xlu0 %303
    %v305 = vperm.slane %v221, 0
    %v306 = vadd.f32 %v304, %v305
    %v307 = vxor.u32 %v306, 2147483648
    %v308 = vmul.f32 %v307, 1.442695
    %v309 = vpow.pop %v308
    %v310 = vadd.f32 %v309, 1.0
    %v311 = vrcp.pop %v310
    %v312 = vmul.f32 %v310, %v311
    %v313 = vsub.f32 1.0, %v312
    %v314 = vmul.f32 %v311, %v313
    %v315 = vadd.f32 %v311, %v314
    %vm316 = vweird.f32 %v310
    %vm317 = vweird.f32 %v311
    %vm318 = vmor %vm316, %vm317
    %v319 = vsel %vm318, %v311, %v315
    %v320 = vand.u32 2147483647, %v310
    %vm321 = vcmp.eq.f32.partialorder %v320, 8.507059e+37
    %v322 = vand.u32 %v310, 2147483648
    %v323 = vor.u32 1.1754944e-38, %v322
    %v324 = vsel %vm321, %v323, %v319
    %v325 = vmul.f32 1.0, %v324
    %v326 = vsel %vm218, %v325, 0.0
    %vm327 = vcmask 7168
    %v328 = vsel %vm327, %v326, 0.0
    %329 = vadd.xlane.f32.xlu0 %v328
    %v330 = vpop.xlane.xlu0 %329
    %v331 = vrot.slane %v330, 4
    %v332 = vadd.f32 %v330, %v331
    %v333 = vrot.slane %v332, 2
    %v334 = vadd.f32 %v332, %v333
    %v335 = vrot.slane %v334, 1
    %v336 = vadd.f32 %v334, %v335
    %s337 = vtos %v336
    %p338 = scmp.gt.f32.partialorder %s337, 0.0
    %v339 = vstv %s337
    %v340 = vrcp.pop %v339
    %v341 = vmul.f32 %v339, %v340
    %v342 = vsub.f32 1.0, %v341
    %v343 = vmul.f32 %v340, %v342
    %v344 = vadd.f32 %v340, %v343
    %vm345 = vweird.f32 %v339
    %vm346 = vweird.f32 %v340
    %vm347 = vmor %vm345, %vm346
    %v348 = vsel %vm347, %v340, %v344
    %v349 = vand.u32 2147483647, %v339
    %vm350 = vcmp.eq.f32.partialorder %v349, 8.507059e+37
    %v351 = vand.u32 %v339, 2147483648
    %v352 = vor.u32 1.1754944e-38, %v351
    %v353 = vsel %vm350, %v352, %v348
    %v354 = vmul.f32 %v326, %v353
    %s355 = scalar_select %p338, 1, 0
    %v356 = vstv %s355
    %vm357 = vcmp.eq.s32.totalorder %v356, 1
    %v358 = vsel %vm357, %v354, %v326
    %360 = vset.pattern.permute.xlu0 0
    %361 = vperm.xlu0 %360, %v358
    %v362 = vpop.permute.xlu0 %361
    %v364 = vmul.f32 %v100, %v362
    %v365 = vsel %vm116, %v364, 0.0
    %v366 = vrot.slane %v365, 4
    %v367 = vadd.f32 %v365, %v366
    %v368 = vrot.slane %v367, 2
    %v369 = vadd.f32 %v367, %v368
    %v370 = vrot.slane %v369, 1
    %v371 = vadd.f32 %v369, %v370
    %v372 = vld [vmem:[#allocation7 + $0x18] sm:$0xff]
    %v373 = vld [vmem:[#allocation7 + $0x20] sm:$0xff]
    %v374 = vld [vmem:[#allocation7 + $0x48] sm:$0xff]
    %v375 = vld [vmem:[#allocation7 + $0x50] sm:$0xff]
    %v376 = vld [vmem:[#allocation7 + $0x78] sm:$0xff]
    %v377 = vld [vmem:[#allocation7 + $0x80] sm:$0xff]
    %v378 = vld [vmem:[#allocation7 + $0xa8] sm:$0xff]
    %v379 = vld [vmem:[#allocation7 + $0xb0] sm:$0xff]
    %v381 = vsel %vm116, %v371, 0
    %383 = vmatpush.msra.mxu0 0.0
    %384 = vmatpush.msra.mxu0 0.0
    %385 = vmatpush.msra.mxu0 0.0
    %386 = vmatpush.msra.mxu0 0.0
    %387 = vmatpush.msra.mxu0 0.0
    %388 = vmatpush.msra.mxu0 0.0
    %389 = vmatpush.msra.mxu0 0.0
    %390 = vmatpush.msra.mxu0 0.0
    %391 = vmatpush.msra.mxu0 0.0
    %392 = vmatpush.msra.mxu0 0.0
    %393 = vmatpush.msra.mxu0 0.0
    %394 = vmatpush.msra.mxu0 0.0
    %395 = vmatpush.msra.mxu0 %v378
    %396 = vmatpush.msra.mxu0 %v376
    %397 = vmatpush.msra.mxu0 %v374
    %398 = vmatpush.msra.mxu0 %v372
    %399 = vmatmul.f32.gmra.mxu0 %v381
    %v400 = vpop.f32.mrf.mxu0
    %v401 = vadd.f32 0.0, %v400
    %402 = vdwg.mxu0
    %403 = vmatpush.msra.mxu0 0.0
    %404 = vmatpush.msra.mxu0 0.0
    %405 = vmatpush.msra.mxu0 0.0
    %406 = vmatpush.msra.mxu0 0.0
    %407 = vmatpush.msra.mxu0 0.0
    %408 = vmatpush.msra.mxu0 0.0
    %409 = vmatpush.msra.mxu0 0.0
    %410 = vmatpush.msra.mxu0 0.0
    %411 = vmatpush.msra.mxu0 0.0
    %412 = vmatpush.msra.mxu0 0.0
    %413 = vmatpush.msra.mxu0 0.0
    %414 = vmatpush.msra.mxu0 0.0
    %415 = vmatpush.msra.mxu0 %v379
    %416 = vmatpush.msra.mxu0 %v377
    %417 = vmatpush.msra.mxu0 %v375
    %418 = vmatpush.msra.mxu0 %v373
    %419 = vmatmul.f32.gmra.mxu0 %v381
    %v420 = vpop.f32.mrf.mxu0
    %v421 = vadd.f32 0.0, %v420
    %422 = vdwg.mxu0
    %v423 = vadd.f32 %v275, %v401
    %v424 = vadd.f32 %v423, %v222
    %v425 = vxor.u32 %v424, 2147483648
    %v426 = vmul.f32 %v425, 1.442695
    %v427 = vpow.pop %v426
    %v428 = vadd.f32 %v427, 1.0
    %v429 = vrcp.pop %v428
    %v430 = vmul.f32 %v428, %v429
    %v431 = vsub.f32 1.0, %v430
    %v432 = vmul.f32 %v429, %v431
    %v433 = vadd.f32 %v429, %v432
    %vm434 = vweird.f32 %v428
    %vm435 = vweird.f32 %v429
    %vm436 = vmor %vm434, %vm435
    %v437 = vsel %vm436, %v429, %v433
    %v438 = vand.u32 2147483647, %v428
    %vm439 = vcmp.eq.f32.partialorder %v438, 8.507059e+37
    %v440 = vand.u32 %v428, 2147483648
    %v441 = vor.u32 1.1754944e-38, %v440
    %v442 = vsel %vm439, %v441, %v437
    %v443 = vmul.f32 1.0, %v442
    %v444 = vadd.f32 %v295, %v421
    %v445 = vadd.f32 %v444, %v223
    %v446 = vmax.f32 %v445, 0.0
    %v447 = vld [vmem:[#allocation7 + $0x28] sm:$0xff]
    %v448 = vld [vmem:[#allocation7 + $0x58] sm:$0xff]
    %v449 = vld [vmem:[#allocation7 + $0x88] sm:$0xff]
    %v450 = vld [vmem:[#allocation7 + $0xb8] sm:$0xff]
    %v452 = vsel %vm116, %v446, 0
    %454 = vmatpush.msra.mxu0 0.0
    %455 = vmatpush.msra.mxu0 0.0
    %456 = vmatpush.msra.mxu0 0.0
    %457 = vmatpush.msra.mxu0 0.0
    %458 = vmatpush.msra.mxu0 0.0
    %459 = vmatpush.msra.mxu0 0.0
    %460 = vmatpush.msra.mxu0 0.0
    %461 = vmatpush.msra.mxu0 0.0
    %462 = vmatpush.msra.mxu0 0.0
    %463 = vmatpush.msra.mxu0 0.0
    %464 = vmatpush.msra.mxu0 0.0
    %465 = vmatpush.msra.mxu0 0.0
    %466 = vmatpush.msra.mxu0 %v450
    %467 = vmatpush.msra.mxu0 %v449
    %468 = vmatpush.msra.mxu0 %v448
    %469 = vmatpush.msra.mxu0 %v447
    %470 = vmatmul.f32.gmra.mxu0 %v452
    %v471 = vpop.f32.mrf.mxu0
    %v472 = vadd.f32 0.0, %v471
    %473 = vdwg.mxu0
    %v474 = vadd.f32 %v472, %v224
    %v475 = vmul.f32 %v443, %v474
    %v476 = vadd.f32 %v100, %v475
    %s477 = scalar_lea.vmem [#allocation8], 8
    %v478 = vld [vmem:[%s477] sm:$0x1]
    %v479 = vld [vmem:[%s477 + $0x1] sm:$0x1]
    %v480 = vld [vmem:[%s477 + $0x2] sm:$0x1]
    %v481 = vld [vmem:[%s477 + $0x3] sm:$0x1]
    %v482 = vld [vmem:[%s477 + $0x4] sm:$0x1]
    %v483 = vld [vmem:[%s477 + $0x5] sm:$0x1]
    %s484 = scalar_lea.vmem [#allocation7], 192
    %v485 = vld [vmem:[%s484] sm:$0xff]
    %v486 = vld [vmem:[%s484 + $0x8] sm:$0xff]
    %v487 = vld [vmem:[%s484 + $0x10] sm:$0xff]
    %v488 = vld [vmem:[%s484 + $0x30] sm:$0xff]
    %v489 = vld [vmem:[%s484 + $0x38] sm:$0xff]
    %v490 = vld [vmem:[%s484 + $0x40] sm:$0xff]
    %v491 = vld [vmem:[%s484 + $0x60] sm:$0xff]
    %v492 = vld [vmem:[%s484 + $0x68] sm:$0xff]
    %v493 = vld [vmem:[%s484 + $0x70] sm:$0xff]
    %v494 = vld [vmem:[%s484 + $0x90] sm:$0xff]
    %v495 = vld [vmem:[%s484 + $0x98] sm:$0xff]
    %v496 = vld [vmem:[%s484 + $0xa0] sm:$0xff]
    %v498 = vsel %vm116, %v476, 0
    %500 = vmatpush.msra.mxu0 0.0
    %501 = vmatpush.msra.mxu0 0.0
    %502 = vmatpush.msra.mxu0 0.0
    %503 = vmatpush.msra.mxu0 0.0
    %504 = vmatpush.msra.mxu0 0.0
    %505 = vmatpush.msra.mxu0 0.0
    %506 = vmatpush.msra.mxu0 0.0
    %507 = vmatpush.msra.mxu0 0.0
    %508 = vmatpush.msra.mxu0 0.0
    %509 = vmatpush.msra.mxu0 0.0
    %510 = vmatpush.msra.mxu0 0.0
    %511 = vmatpush.msra.mxu0 0.0
    %512 = vmatpush.msra.mxu0 %v494
    %513 = vmatpush.msra.mxu0 %v491
    %514 = vmatpush.msra.mxu0 %v488
    %515 = vmatpush.msra.mxu0 %v485
    %516 = vmatmul.f32.gmra.mxu0 %v498
    %v517 = vpop.f32.mrf.mxu0
    %v518 = vadd.f32 0.0, %v517
    %519 = vdwg.mxu0
    %520 = vmatpush.msra.mxu0 0.0
    %521 = vmatpush.msra.mxu0 0.0
    %522 = vmatpush.msra.mxu0 0.0
    %523 = vmatpush.msra.mxu0 0.0
    %524 = vmatpush.msra.mxu0 0.0
    %525 = vmatpush.msra.mxu0 0.0
    %526 = vmatpush.msra.mxu0 0.0
    %527 = vmatpush.msra.mxu0 0.0
    %528 = vmatpush.msra.mxu0 0.0
    %529 = vmatpush.msra.mxu0 0.0
    %530 = vmatpush.msra.mxu0 0.0
    %531 = vmatpush.msra.mxu0 0.0
    %532 = vmatpush.msra.mxu0 %v495
    %533 = vmatpush.msra.mxu0 %v492
    %534 = vmatpush.msra.mxu0 %v489
    %535 = vmatpush.msra.mxu0 %v486
    %536 = vmatmul.f32.gmra.mxu0 %v498
    %v537 = vpop.f32.mrf.mxu0
    %v538 = vadd.f32 0.0, %v537
    %539 = vdwg.mxu0
    %540 = vmatpush.msra.mxu0 0.0
    %541 = vmatpush.msra.mxu0 0.0
    %542 = vmatpush.msra.mxu0 0.0
    %543 = vmatpush.msra.mxu0 0.0
    %544 = vmatpush.msra.mxu0 0.0
    %545 = vmatpush.msra.mxu0 0.0
    %546 = vmatpush.msra.mxu0 0.0
    %547 = vmatpush.msra.mxu0 0.0
    %548 = vmatpush.msra.mxu0 0.0
    %549 = vmatpush.msra.mxu0 0.0
    %550 = vmatpush.msra.mxu0 0.0
    %551 = vmatpush.msra.mxu0 0.0
    %552 = vmatpush.msra.mxu0 %v496
    %553 = vmatpush.msra.mxu0 %v493
    %554 = vmatpush.msra.mxu0 %v490
    %555 = vmatpush.msra.mxu0 %v487
    %556 = vmatmul.f32.gmra.mxu0 %v498
    %v557 = vpop.f32.mrf.mxu0
    %v558 = vadd.f32 0.0, %v557
    %559 = vdwg.mxu0
    %v560 = vadd.f32 %v518, %v478
    %v561 = vperm.slane %v560, 0
    %v562 = vadd.f32 %v561, %v214
    %v563 = vmax.f32 %v562, 0.0
    %v564 = vperm.slane %v479, 0
    %v565 = vmul.f32 %v563, %v564
    %566 = vadd.xlane.f32.xlu0 %v565
    %v567 = vpop.xlane.xlu0 %566
    %v568 = vperm.slane %v480, 0
    %v569 = vadd.f32 %v567, %v568
    %v570 = vxor.u32 %v569, 2147483648
    %v571 = vmul.f32 %v570, 1.442695
    %v572 = vpow.pop %v571
    %v573 = vadd.f32 %v572, 1.0
    %v574 = vrcp.pop %v573
    %v575 = vmul.f32 %v573, %v574
    %v576 = vsub.f32 1.0, %v575
    %v577 = vmul.f32 %v574, %v576
    %v578 = vadd.f32 %v574, %v577
    %vm579 = vweird.f32 %v573
    %vm580 = vweird.f32 %v574
    %vm581 = vmor %vm579, %vm580
    %v582 = vsel %vm581, %v574, %v578
    %v583 = vand.u32 2147483647, %v573
    %vm584 = vcmp.eq.f32.partialorder %v583, 8.507059e+37
    %v585 = vand.u32 %v573, 2147483648
    %v586 = vor.u32 1.1754944e-38, %v585
    %v587 = vsel %vm584, %v586, %v582
    %v588 = vmul.f32 1.0, %v587
    %v589 = vsel %vm218, %v588, 0.0
    %v590 = vsel %vm327, %v589, 0.0
    %591 = vadd.xlane.f32.xlu0 %v590
    %v592 = vpop.xlane.xlu0 %591
    %v593 = vrot.slane %v592, 4
    %v594 = vadd.f32 %v592, %v593
    %v595 = vrot.slane %v594, 2
    %v596 = vadd.f32 %v594, %v595
    %v597 = vrot.slane %v596, 1
    %v598 = vadd.f32 %v596, %v597
    %s599 = vtos %v598
    %p600 = scmp.gt.f32.partialorder %s599, 0.0
    %v601 = vstv %s599
    %v602 = vrcp.pop %v601
    %v603 = vmul.f32 %v601, %v602
    %v604 = vsub.f32 1.0, %v603
    %v605 = vmul.f32 %v602, %v604
    %v606 = vadd.f32 %v602, %v605
    %vm607 = vweird.f32 %v601
    %vm608 = vweird.f32 %v602
    %vm609 = vmor %vm607, %vm608
    %v610 = vsel %vm609, %v602, %v606
    %v611 = vand.u32 2147483647, %v601
    %vm612 = vcmp.eq.f32.partialorder %v611, 8.507059e+37
    %v613 = vand.u32 %v601, 2147483648
    %v614 = vor.u32 1.1754944e-38, %v613
    %v615 = vsel %vm612, %v614, %v610
    %v616 = vmul.f32 %v589, %v615
    %s617 = scalar_select %p600, 1, 0
    %v618 = vstv %s617
    %vm619 = vcmp.eq.s32.totalorder %v618, 1
    %v620 = vsel %vm619, %v616, %v589
    %622 = vset.pattern.permute.xlu0 0
    %623 = vperm.xlu0 %622, %v620
    %v624 = vpop.permute.xlu0 %623
    %v626 = vmul.f32 %v100, %v624
    %v627 = vsel %vm116, %v626, 0.0
    %v628 = vrot.slane %v627, 4
    %v629 = vadd.f32 %v627, %v628
    %v630 = vrot.slane %v629, 2
    %v631 = vadd.f32 %v629, %v630
    %v632 = vrot.slane %v631, 1
    %v633 = vadd.f32 %v631, %v632
    %v634 = vld [vmem:[%s484 + $0x18] sm:$0xff]
    %v635 = vld [vmem:[%s484 + $0x20] sm:$0xff]
    %v636 = vld [vmem:[%s484 + $0x48] sm:$0xff]
    %v637 = vld [vmem:[%s484 + $0x50] sm:$0xff]
    %v638 = vld [vmem:[%s484 + $0x78] sm:$0xff]
    %v639 = vld [vmem:[%s484 + $0x80] sm:$0xff]
    %v640 = vld [vmem:[%s484 + $0xa8] sm:$0xff]
    %v641 = vld [vmem:[%s484 + $0xb0] sm:$0xff]
    %v643 = vsel %vm116, %v633, 0
    %645 = vmatpush.msra.mxu0 0.0
    %646 = vmatpush.msra.mxu0 0.0
    %647 = vmatpush.msra.mxu0 0.0
    %648 = vmatpush.msra.mxu0 0.0
    %649 = vmatpush.msra.mxu0 0.0
    %650 = vmatpush.msra.mxu0 0.0
    %651 = vmatpush.msra.mxu0 0.0
    %652 = vmatpush.msra.mxu0 0.0
    %653 = vmatpush.msra.mxu0 0.0
    %654 = vmatpush.msra.mxu0 0.0
    %655 = vmatpush.msra.mxu0 0.0
    %656 = vmatpush.msra.mxu0 0.0
    %657 = vmatpush.msra.mxu0 %v640
    %658 = vmatpush.msra.mxu0 %v638
    %659 = vmatpush.msra.mxu0 %v636
    %660 = vmatpush.msra.mxu0 %v634
    %661 = vmatmul.f32.gmra.mxu0 %v643
    %v662 = vpop.f32.mrf.mxu0
    %v663 = vadd.f32 0.0, %v662
    %664 = vdwg.mxu0
    %665 = vmatpush.msra.mxu0 0.0
    %666 = vmatpush.msra.mxu0 0.0
    %667 = vmatpush.msra.mxu0 0.0
    %668 = vmatpush.msra.mxu0 0.0
    %669 = vmatpush.msra.mxu0 0.0
    %670 = vmatpush.msra.mxu0 0.0
    %671 = vmatpush.msra.mxu0 0.0
    %672 = vmatpush.msra.mxu0 0.0
    %673 = vmatpush.msra.mxu0 0.0
    %674 = vmatpush.msra.mxu0 0.0
    %675 = vmatpush.msra.mxu0 0.0
    %676 = vmatpush.msra.mxu0 0.0
    %677 = vmatpush.msra.mxu0 %v641
    %678 = vmatpush.msra.mxu0 %v639
    %679 = vmatpush.msra.mxu0 %v637
    %680 = vmatpush.msra.mxu0 %v635
    %681 = vmatmul.f32.gmra.mxu0 %v643
    %v682 = vpop.f32.mrf.mxu0
    %v683 = vadd.f32 0.0, %v682
    %684 = vdwg.mxu0
    %v685 = vadd.f32 %v538, %v663
    %v686 = vadd.f32 %v685, %v481
    %v687 = vxor.u32 %v686, 2147483648
    %v688 = vmul.f32 %v687, 1.442695
    %v689 = vpow.pop %v688
    %v690 = vadd.f32 %v689, 1.0
    %v691 = vrcp.pop %v690
    %v692 = vmul.f32 %v690, %v691
    %v693 = vsub.f32 1.0, %v692
    %v694 = vmul.f32 %v691, %v693
    %v695 = vadd.f32 %v691, %v694
    %vm696 = vweird.f32 %v690
    %vm697 = vweird.f32 %v691
    %vm698 = vmor %vm696, %vm697
    %v699 = vsel %vm698, %v691, %v695
    %v700 = vand.u32 2147483647, %v690
    %vm701 = vcmp.eq.f32.partialorder %v700, 8.507059e+37
    %v702 = vand.u32 %v690, 2147483648
    %v703 = vor.u32 1.1754944e-38, %v702
    %v704 = vsel %vm701, %v703, %v699
    %v705 = vmul.f32 1.0, %v704
    %v706 = vadd.f32 %v558, %v683
    %v707 = vadd.f32 %v706, %v482
    %v708 = vmax.f32 %v707, 0.0
    %v709 = vld [vmem:[%s484 + $0x28] sm:$0xff]
    %v710 = vld [vmem:[%s484 + $0x58] sm:$0xff]
    %v711 = vld [vmem:[%s484 + $0x88] sm:$0xff]
    %v712 = vld [vmem:[%s484 + $0xb8] sm:$0xff]
    %v714 = vsel %vm116, %v708, 0
    %716 = vmatpush.msra.mxu0 0.0
    %717 = vmatpush.msra.mxu0 0.0
    %718 = vmatpush.msra.mxu0 0.0
    %719 = vmatpush.msra.mxu0 0.0
    %720 = vmatpush.msra.mxu0 0.0
    %721 = vmatpush.msra.mxu0 0.0
    %722 = vmatpush.msra.mxu0 0.0
    %723 = vmatpush.msra.mxu0 0.0
    %724 = vmatpush.msra.mxu0 0.0
    %725 = vmatpush.msra.mxu0 0.0
    %726 = vmatpush.msra.mxu0 0.0
    %727 = vmatpush.msra.mxu0 0.0
    %728 = vmatpush.msra.mxu0 %v712
    %729 = vmatpush.msra.mxu0 %v711
    %730 = vmatpush.msra.mxu0 %v710
    %731 = vmatpush.msra.mxu0 %v709
    %732 = vmatmul.f32.gmra.mxu0 %v714
    %v733 = vpop.f32.mrf.mxu0
    %v734 = vadd.f32 0.0, %v733
    %735 = vdwg.mxu0
    %v736 = vadd.f32 %v734, %v483
    %v737 = vmul.f32 %v705, %v736
    %v738 = vadd.f32 %v476, %v737
    %v740 = vsel %vm116, %v738, 0
    %742 = vmatpush.msra.mxu0 0.0
    %743 = vmatpush.msra.mxu0 0.0
    %744 = vmatpush.msra.mxu0 0.0
    %745 = vmatpush.msra.mxu0 0.0
    %746 = vmatpush.msra.mxu0 0.0
    %747 = vmatpush.msra.mxu0 0.0
    %748 = vmatpush.msra.mxu0 0.0
    %749 = vmatpush.msra.mxu0 0.0
    %750 = vmatpush.msra.mxu0 0.0
    %751 = vmatpush.msra.mxu0 0.0
    %752 = vmatpush.msra.mxu0 0.0
    %753 = vmatpush.msra.mxu0 0.0
    %754 = vmatpush.msra.mxu0 %v104
    %755 = vmatpush.msra.mxu0 %v103
    %756 = vmatpush.msra.mxu0 %v102
    %757 = vmatpush.msra.mxu0 %v101
    %758 = vmatmul.f32.gmra.mxu0 %v740
    %v759 = vpop.f32.mrf.mxu0
    %v760 = vadd.f32 %v110, %v759
    %761 = vdwg.mxu0
    %v762 = vmax.f32 %v760, 0.0
    %v764 = vsel %vm116, %v762, 0
    %766 = vmatpush.msra.mxu0 0.0
    %767 = vmatpush.msra.mxu0 0.0
    %768 = vmatpush.msra.mxu0 0.0
    %769 = vmatpush.msra.mxu0 0.0
    %770 = vmatpush.msra.mxu0 0.0
    %771 = vmatpush.msra.mxu0 0.0
    %772 = vmatpush.msra.mxu0 0.0
    %773 = vmatpush.msra.mxu0 0.0
    %774 = vmatpush.msra.mxu0 0.0
    %775 = vmatpush.msra.mxu0 0.0
    %776 = vmatpush.msra.mxu0 0.0
    %777 = vmatpush.msra.mxu0 0.0
    %778 = vmatpush.msra.mxu0 %v109
    %779 = vmatpush.msra.mxu0 %v108
    %780 = vmatpush.msra.mxu0 %v107
    %781 = vmatpush.msra.mxu0 %v106
    %782 = vmatmul.f32.gmra.mxu0 %v764
    %v783 = vpop.f32.mrf.mxu0
    %v784 = vadd.f32 %v112, %v783
    %785 = vdwg.mxu0
    %vm786 = vcmask 253952
    %787 = vst.msk [vmem:[#allocation11] sm:$0x1] %vm786, %v784
    // Predicated region
    $region46: #{tpu_custom_call.1} parent=1 // pred_check
      _
    $region47: #{tpu_custom_call.1} parent=1 // pred_check_branch
      %789 = sbr.rel (0) target = $region49
    $region48: #{tpu_custom_call.1} parent=1 // pred_region
      %791 = vsyncadd [#allocation4], 0
      %s793 = sshll.u32 [#allocation11], 4
      %s794 = int_to_ptr.vmem [resolvable:$true] %s793
      %s795 = sshll.u32 %s6, 4
      %s796 = int_to_ptr.hbm [resolvable:$true] %s795
      %798 = dma.vmem_to_hbm [thread:$0]  %s794, 128, %s796, [#allocation4]
    $region49: #{tpu_custom_call.1} parent=1 // pred_fallthru
      _
    // Predicated region
    $region50: #{tpu_custom_call.1} parent=1 // pred_check
      _
    $region51: #{tpu_custom_call.1} parent=1 // pred_check_branch
      %800 = sbr.rel (0) target = $region53
    $region52: #{tpu_custom_call.1} parent=1 // pred_region
      %802 = dma.done [#allocation4], 128
    $region53: #{tpu_custom_call.1} parent=1 // pred_fallthru
      _
    %803 = vsyncpa [#allocation3], 1
    %804 = vsyncpa [#allocation6], 1
    %805 = vsyncpa [#allocation9], 1
    %806 = vsyncpa [#allocation4], 1

</llo_original>
